<compile_context>
chip_gen: v7x
topology: tpu7x:2x2x1
jax: 0.10.0
libtpu: 0.0.40
codegen_flags: <defaults>
</compile_context>

<pallas_src>
import jax
import jax.numpy as jnp
from jax.experimental import pallas as pl
from jax.experimental.pallas import tpu as pltpu

LANE = 128          # lane width of a vreg
MAX_TILE_ROWS = 2048  # sublane rows per grid step (tile = MAX_TILE_ROWS x 128 f32)


def quadratic_neuron_kernel(p_ref, x1_ref, x2_ref, o_ref):
    # p_ref : SMEM (6,)        -> [w1, w2, w3, w4, w5, b]
    # x1/x2 : VMEM (TR, 128)   -> dense per-feature tiles
    # o_ref : VMEM (TR, 128)
    w1 = p_ref[0]
    w2 = p_ref[1]
    w3 = p_ref[2]
    w4 = p_ref[3]
    w5 = p_ref[4]
    b = p_ref[5]
    x1 = x1_ref[...]
    x2 = x2_ref[...]
    # Horner-style factoring: 5 muls + 5 adds (vs 8 muls in the naive form).
    o_ref[...] = x1 * (w1 * x1 + w3 * x2 + w4) + x2 * (w2 * x2 + w5) + b


@jax.jit
def quadratic_neuron(x, params):
    """x: (N, 2) float32, params: (6,) float32 -> (N,) float32."""
    n = x.shape[0]

    # --- layout: pad batch to a lane multiple, reshape to dense (R, 128) ----
    r = pl.cdiv(n, LANE)                    # rows of 128 samples
    r_pad = pl.cdiv(r, 8) * 8               # sublane-align the row count
    tr = min(MAX_TILE_ROWS, r_pad)          # rows per grid step
    grid_r = pl.cdiv(r_pad, tr)
    r_pad = grid_r * tr                     # make the grid divide evenly
    total = r_pad * LANE
    pad = total - n

    x1 = x[:, 0]
    x2 = x[:, 1]
    if pad:
        x1 = jnp.pad(x1, (0, pad))
        x2 = jnp.pad(x2, (0, pad))
    x1 = x1.reshape(r_pad, LANE)            # lane-dense per-feature planes
    x2 = x2.reshape(r_pad, LANE)

    # --- VMEM budget: 3 arrays x 2 pipeline buffers x block, plus headroom ---
    block_bytes = tr * LANE * 4
    vmem_limit = min(32 << 20, max(4 << 20, 4 * 3 * block_bytes))

    out = pl.pallas_call(
        quadratic_neuron_kernel,
        out_shape=jax.ShapeDtypeStruct((r_pad, LANE), x.dtype),
        grid=(grid_r,),
        in_specs=[
            pl.BlockSpec(memory_space=pltpu.MemorySpace.SMEM),       # params
            pl.BlockSpec((tr, LANE), lambda i: (i, 0)),              # x1 tiles
            pl.BlockSpec((tr, LANE), lambda i: (i, 0)),              # x2 tiles
        ],
        out_specs=pl.BlockSpec((tr, LANE), lambda i: (i, 0)),
        compiler_params=pltpu.CompilerParams(
            dimension_semantics=("parallel",),
            vmem_limit_bytes=vmem_limit,
        ),
    )(params, x1, x2)

    # Drop padded rows; output matches the PyTorch forward's (N,) shape.
    return out.reshape(-1)[:n]


if __name__ == "__main__":
    key = jax.random.PRNGKey(0)
    k_xa, k_xb, k_p = jax.random.split(key, 3)

    # Deterministic "randn(1)" parameters w1..w5, b flattened to a (6,) vector.
    params = jax.random.normal(k_p, (6,), dtype=jnp.float32)

    def reference(x, p):
        x1, x2 = x[:, 0], x[:, 1]
        w1, w2, w3, w4, w5, b = [p[i] for i in range(6)]
        return w1 * x1 ** 2 + w2 * x2 ** 2 + w3 * x1 * x2 + w4 * x1 + w5 * x2 + b

    # Small shapes consistent with the module: (batch, 2). The second case
    # exercises the padding / lane-alignment path (batch not a multiple of 128).
    for n, kk in ((8, k_xa), (1000, k_xb)):
        x = jax.random.normal(kk, (n, 2), dtype=jnp.float32)
        z = jax.block_until_ready(quadratic_neuron(x, params))
        z_ref = reference(x, params)
        assert z.shape == (n,)
        assert jnp.allclose(z, z_ref, atol=1e-5, rtol=1e-5)

    print("KERNEL_OK")
</pallas_src>

<mosaic_0001>
module attributes {stable_mosaic.version = 11 : i64} {
  func.func @quadratic_neuron_kernel(%arg0: i32, %arg1: memref<6xf32, #tpu.memory_space<smem>>, %arg2: memref<8x128xf32, #tpu.memory_space<vmem>>, %arg3: memref<8x128xf32, #tpu.memory_space<vmem>>, %arg4: memref<8x128xf32, #tpu.memory_space<vmem>>) attributes {dimension_semantics = [#tpu.dimension_semantics<parallel>], iteration_bounds = array<i64: 1>, scalar_prefetch = 0 : i64, scratch_operands = 0 : i64, tpu.core_type = #tpu.core_type<tc>, window_params = [{transform_indices = @transform_0, window_bounds = array<i64: 6>}, {transform_indices = @transform_1, window_bounds = array<i64: 8, 128>}, {transform_indices = @transform_2, window_bounds = array<i64: 8, 128>}, {transform_indices = @transform_3, window_bounds = array<i64: 8, 128>}]} {
    %c0 = arith.constant 0 : index
    %0 = memref.load %arg1[%c0] : memref<6xf32, #tpu.memory_space<smem>>
    %c1 = arith.constant 1 : index
    %1 = memref.load %arg1[%c1] : memref<6xf32, #tpu.memory_space<smem>>
    %c2 = arith.constant 2 : index
    %2 = memref.load %arg1[%c2] : memref<6xf32, #tpu.memory_space<smem>>
    %c3 = arith.constant 3 : index
    %3 = memref.load %arg1[%c3] : memref<6xf32, #tpu.memory_space<smem>>
    %c4 = arith.constant 4 : index
    %4 = memref.load %arg1[%c4] : memref<6xf32, #tpu.memory_space<smem>>
    %c5 = arith.constant 5 : index
    %5 = memref.load %arg1[%c5] : memref<6xf32, #tpu.memory_space<smem>>
    %c0_0 = arith.constant 0 : index
    %c0_1 = arith.constant 0 : index
    %6 = vector.load %arg2[%c0_0, %c0_1] : memref<8x128xf32, #tpu.memory_space<vmem>>, vector<8x128xf32>
    %c0_2 = arith.constant 0 : index
    %c0_3 = arith.constant 0 : index
    %7 = vector.load %arg3[%c0_2, %c0_3] : memref<8x128xf32, #tpu.memory_space<vmem>>, vector<8x128xf32>
    %8 = vector.broadcast %0 : f32 to vector<8x128xf32>
    %9 = arith.mulf %8, %6 : vector<8x128xf32>
    %10 = vector.broadcast %2 : f32 to vector<8x128xf32>
    %11 = arith.mulf %10, %7 : vector<8x128xf32>
    %12 = arith.addf %9, %11 : vector<8x128xf32>
    %13 = vector.broadcast %3 : f32 to vector<8x128xf32>
    %14 = arith.addf %12, %13 : vector<8x128xf32>
    %15 = arith.mulf %6, %14 : vector<8x128xf32>
    %16 = vector.broadcast %1 : f32 to vector<8x128xf32>
    %17 = arith.mulf %16, %7 : vector<8x128xf32>
    %18 = vector.broadcast %4 : f32 to vector<8x128xf32>
    %19 = arith.addf %17, %18 : vector<8x128xf32>
    %20 = arith.mulf %7, %19 : vector<8x128xf32>
    %21 = arith.addf %15, %20 : vector<8x128xf32>
    %22 = vector.broadcast %5 : f32 to vector<8x128xf32>
    %23 = arith.addf %21, %22 : vector<8x128xf32>
    %c0_4 = arith.constant 0 : index
    %c0_5 = arith.constant 0 : index
    %24 = vector.load %arg4[%c0_4, %c0_5] : memref<8x128xf32, #tpu.memory_space<vmem>>, vector<8x128xf32>
    tpu.vector_store %arg4[%c0_4, %c0_5], %23 {strides = array<i32>} : memref<8x128xf32, #tpu.memory_space<vmem>>, vector<8x128xf32>,
    return
  }
  func.func @transform_0(%arg0: i32) -> i32 {
    %c0_i32 = arith.constant 0 : i32
    %c0_i32_0 = arith.constant 0 : i32
    return %c0_i32 : i32
  }
  func.func @transform_1(%arg0: i32) -> (i32, i32) {
    %c0_i32 = arith.constant 0 : i32
    %c0_i32_0 = arith.constant 0 : i32
    return %arg0, %c0_i32 : i32, i32
  }
  func.func @transform_2(%arg0: i32) -> (i32, i32) {
    %c0_i32 = arith.constant 0 : i32
    %c0_i32_0 = arith.constant 0 : i32
    return %arg0, %c0_i32 : i32, i32
  }
  func.func @transform_3(%arg0: i32) -> (i32, i32) {
    %c0_i32 = arith.constant 0 : i32
    %c0_i32_0 = arith.constant 0 : i32
    return %arg0, %c0_i32 : i32, i32
  }
}

</mosaic_0001>

<llo_original>
// kernel: quadratic_neuron.1
$region0: #{quadratic_neuron.1}
  #allocation0 [shape = 'u32[]', space=smem, size = 0x4, offset = 0x4, fixed_abs, tag = 'smem constant byte address 0x4 - core index']
  #allocation1 [shape = 'u32[144,128]{1,0:T(1,128)}', space=vmem, size = 0x12000, scoped, tag = 'internal scratch']
  %s0 = inlined_call_operand.vmem [shape: f32[6], index: 0, kind: input, shape index: {}]
  %s1 = inlined_call_operand.vmem [shape: f32[8,128], index: 1, kind: input, shape index: {}]
  %s2 = inlined_call_operand.vmem [shape: f32[8,128], index: 2, kind: input, shape index: {}]
  %s3 = inlined_call_operand.vmem [shape: f32[8,128], index: 3, kind: output, shape index: {}]
  %s4 = sld [smem:[#allocation0]]
  $region26: #{quadratic_neuron.1} parent=0
    _
  %s6 = ssub.s32 1, %s4
  %s7 = scalar_select 0, %s6, %s4
  $region1: #{quadratic_neuron.1} parent=0
    #allocation2 [shape = 'u8[512]{0}', space=smem, size = 0x200, scoped, tag = 'input window, operand 0, single buffered']
    #allocation3 [shape = 's32[1]{0}', space=sflag, size = 0x4, scoped, tag = 'scoped memory for quadratic_neuron.1']
    %8 = vsyncpa [#allocation3], 0
    // Predicated region
    $region2: #{quadratic_neuron.1} parent=1 // pred_check
      _
    $region3: #{quadratic_neuron.1} parent=1 // pred_check_branch
      %10 = sbr.rel (0) target = $region5
    $region4: #{quadratic_neuron.1} parent=1 // pred_region
      %s12 = ssub.s32 16, 16
      %13 = vsyncadd [#allocation3], %s12
      %s15 = sshll.u32 %s0, 4
      %s16 = int_to_ptr.vmem [resolvable:$true] %s15
      %18 = dma.vmem_to_smem %s16, 16, [#allocation2], [#allocation3]
    $region5: #{quadratic_neuron.1} parent=1 // pred_fallthru
      _
    // Predicated region
    $region6: #{quadratic_neuron.1} parent=1 // pred_check
      _
    $region7: #{quadratic_neuron.1} parent=1 // pred_check_branch
      %20 = sbr.rel (0) target = $region9
    $region8: #{quadratic_neuron.1} parent=1 // pred_region
      _
    $region9: #{quadratic_neuron.1} parent=1 // pred_fallthru
      _
    // Predicated region
    $region10: #{quadratic_neuron.1} parent=1 // pred_check
      _
    $region11: #{quadratic_neuron.1} parent=1 // pred_check_branch
      %22 = sbr.rel (0) target = $region13
    $region12: #{quadratic_neuron.1} parent=1 // pred_region
      _
    $region13: #{quadratic_neuron.1} parent=1 // pred_fallthru
      _
    // Predicated region
    $region14: #{quadratic_neuron.1} parent=1 // pred_check
      _
    $region15: #{quadratic_neuron.1} parent=1 // pred_check_branch
      %24 = sbr.rel (0) target = $region17
    $region16: #{quadratic_neuron.1} parent=1 // pred_region
      %25 = dma.done [#allocation3], 16
    $region17: #{quadratic_neuron.1} parent=1 // pred_fallthru
      _
    %26 = sfence
    %s27 = sld [smem:[#allocation2]]
    %s28 = sld [smem:[#allocation2 + $0x1]]
    %s29 = sld [smem:[#allocation2 + $0x2]]
    %s30 = sld [smem:[#allocation2 + $0x3]]
    %s31 = sld [smem:[#allocation2 + $0x4]]
    %s32 = sld [smem:[#allocation2 + $0x5]]
    %v33 = vld [vmem:[%s1] sm:$0xff]
    %v34 = vld [vmem:[%s2] sm:$0xff]
    %v35 = vstv %s27
    %v36 = vmul.f32 %v35, %v33
    %v37 = vstv %s29
    %v38 = vmul.f32 %v37, %v34
    %v39 = vadd.f32 %v36, %v38
    %v40 = vstv %s30
    %v41 = vadd.f32 %v39, %v40
    %v42 = vmul.f32 %v33, %v41
    %v43 = vstv %s28
    %v44 = vmul.f32 %v43, %v34
    %v45 = vstv %s31
    %v46 = vadd.f32 %v44, %v45
    %v47 = vmul.f32 %v34, %v46
    %v48 = vadd.f32 %v42, %v47
    %v49 = vstv %s32
    %v50 = vadd.f32 %v48, %v49
    %51 = vst [vmem:[%s3] sm:$0xff] %v50
    // Predicated region
    $region18: #{quadratic_neuron.1} parent=1 // pred_check
      _
    $region19: #{quadratic_neuron.1} parent=1 // pred_check_branch
      %53 = sbr.rel (0) target = $region21
    $region20: #{quadratic_neuron.1} parent=1 // pred_region
      _
    $region21: #{quadratic_neuron.1} parent=1 // pred_fallthru
      _
    // Predicated region
    $region22: #{quadratic_neuron.1} parent=1 // pred_check
      _
    $region23: #{quadratic_neuron.1} parent=1 // pred_check_branch
      %55 = sbr.rel (0) target = $region25
    $region24: #{quadratic_neuron.1} parent=1 // pred_region
      _
    $region25: #{quadratic_neuron.1} parent=1 // pred_fallthru
      _
    %56 = vsyncpa [#allocation3], 1

</llo_original>
